<compile_context>
chip_gen: v7x
topology: tpu7x:2x2x1
jax: 0.10.0
libtpu: 0.0.40
codegen_flags: <defaults>
</compile_context>

<pallas_src>
import functools

import jax
import jax.numpy as jnp
from jax.experimental import pallas as pl
from jax.experimental.pallas import tpu as pltpu


def _taylor_series_linear_kernel(seq_len, pos_ref, vel_ref, time_ref, out_ref):
    """One batch-block of the loss: emits a single partial sum of norms."""
    pos = pos_ref[...].astype(jnp.float32)   # [bb, D, Tp]   (T on lanes)
    vel = vel_ref[...].astype(jnp.float32)   # [bb, D, Tp]
    tt = time_ref[...].astype(jnp.float32)   # [bb, Tp]

    bb, _, tp = pos.shape

    # "Next time step" values along the lane (T) axis.  With T on lanes this is
    # an in-register lane rotate; the wrapped-around / padded lanes are masked
    # out below.  (jnp.roll(x, -1) == element t takes value from t+1.)
    pos_next = jnp.roll(pos, shift=-1, axis=-1)      # [bb, D, Tp]
    t_next = jnp.roll(tt, shift=-1, axis=-1)         # [bb, Tp]

    # Valid finite-difference positions: t in [0, T-2].
    lane_idx = jax.lax.broadcasted_iota(jnp.int32, (bb, tp), 1)
    valid = lane_idx < (seq_len - 1)                 # [bb, Tp] bool

    dt = t_next - tt
    dt_safe = jnp.where(valid, dt, 1.0)              # keep masked lanes finite
    inv_dt = pl.reciprocal(dt_safe, approx=True)     # EUP slot, once per (b, t)

    vel_est = (pos_next - pos) * inv_dt[:, None, :]  # [bb, D, Tp]
    diff = vel - vel_est
    sq = jnp.sum(diff * diff, axis=1)                # [bb, Tp]  (sublane reduce over D)
    norms = jnp.where(valid, jnp.sqrt(sq), 0.0)

    partial = jnp.sum(norms)                         # scalar partial for this block
    # Broadcast the scalar across a full (8, 128) tile -> unmasked lane-dense
    # store; the wrapper reads element [0, 0] of each block.
    out_ref[...] = jnp.full(out_ref.shape, partial, dtype=jnp.float32)


def taylor_series_linear(position, velocity, time, reduction="mean", *,
                         batch_block=None):
    """Pallas TPU implementation of TaylorSeriesLinear.forward.

    position, velocity: [B, T, D]; time: [B, T].
    """
    B, T, D = position.shape
    assert velocity.shape == (B, T, D) and time.shape == (B, T)
    assert T >= 2

    # ---- lane-dense relayout in the wrapper: [B, T, D] -> [B, D, Tp] ----
    Tp = pl.cdiv(T, 128) * 128
    pos_bdt = jnp.transpose(position.astype(jnp.float32), (0, 2, 1))
    vel_bdt = jnp.transpose(velocity.astype(jnp.float32), (0, 2, 1))
    pad_t = Tp - T
    if pad_t:
        pos_bdt = jnp.pad(pos_bdt, ((0, 0), (0, 0), (0, pad_t)))
        vel_bdt = jnp.pad(vel_bdt, ((0, 0), (0, 0), (0, pad_t)))

    # ---- pick a batch block (~2 MiB per input block incl. sublane padding of
    # D -> 8), safe for v5e's 16 MiB scoped VMEM and v7x's smaller VMEM. ----
    d_pad = max(8, ((D + 7) // 8) * 8)
    if batch_block is None:
        bb = max(1, (2 << 20) // (d_pad * Tp * 4))
    else:
        bb = int(batch_block)
    if bb >= B:
        bb = B
        Bp = B
    else:
        bb = max(8, (bb // 8) * 8)          # keep the 2-D time block sublane-aligned
        Bp = pl.cdiv(B, bb) * bb
    G = Bp // bb

    pad_b = Bp - B
    if pad_b:
        pos_bdt = jnp.pad(pos_bdt, ((0, pad_b), (0, 0), (0, 0)))
        vel_bdt = jnp.pad(vel_bdt, ((0, pad_b), (0, 0), (0, 0)))

    # time -> [Bp, Tp]; padded entries get a strictly increasing ramp so dt > 0
    # there (their position/velocity are zero, so they contribute exactly 0).
    ramp = jnp.broadcast_to(jnp.arange(Tp, dtype=jnp.float32), (Bp, Tp))
    time_bt = ramp.at[:B, :T].set(time.astype(jnp.float32))

    kernel = functools.partial(_taylor_series_linear_kernel, T)

    partials = pl.pallas_call(
        kernel,
        out_shape=jax.ShapeDtypeStruct((G, 8, 128), jnp.float32),
        grid=(G,),
        in_specs=[
            pl.BlockSpec((bb, D, Tp), lambda i: (i, 0, 0)),   # position [B, D, Tp]
            pl.BlockSpec((bb, D, Tp), lambda i: (i, 0, 0)),   # velocity [B, D, Tp]
            pl.BlockSpec((bb, Tp), lambda i: (i, 0)),         # time     [B, Tp]
        ],
        out_specs=pl.BlockSpec((1, 8, 128), lambda i: (i, 0, 0)),
        compiler_params=pltpu.CompilerParams(
            dimension_semantics=("parallel",),                # lets v7x use both TCs
        ),
    )(pos_bdt, vel_bdt, time_bt)

    total = jnp.sum(partials[:, 0, 0])
    if reduction == "mean":
        # Compile-time constant scale instead of an in-kernel mean.
        total = total * (1.0 / float(B * (T - 1)))
    return total


def _reference(position, velocity, time, reduction="mean"):
    position_diff = position[:, 1:, :] - position[:, :-1, :]
    dt = time[:, 1:] - time[:, :-1]
    vel_est = position_diff / dt[:, :, None]
    norms = jnp.sqrt(jnp.sum((velocity[:, :-1, :] - vel_est) ** 2, axis=2))
    return jnp.mean(norms) if reduction == "mean" else jnp.sum(norms)


if __name__ == "__main__":
    key = jax.random.PRNGKey(0)
    k1, k2, k3, k4 = jax.random.split(key, 4)

    # --- small shape (single grid block) ---
    B, T, D = 2, 8, 3
    position = jax.random.normal(k1, (B, T, D), dtype=jnp.float32)
    velocity = jax.random.normal(k2, (B, T, D), dtype=jnp.float32)
    time = jnp.broadcast_to(1.0 + 0.1 * jnp.arange(T, dtype=jnp.float32), (B, T))

    out_mean = taylor_series_linear(position, velocity, time, reduction="mean")
    out_sum = taylor_series_linear(position, velocity, time, reduction="sum")
    jax.block_until_ready((out_mean, out_sum))

    ref_mean = _reference(position, velocity, time, "mean")
    ref_sum = _reference(position, velocity, time, "sum")
    # approx reciprocal (EUP) in-kernel -> slightly relaxed tolerance.
    assert jnp.allclose(out_mean, ref_mean, rtol=5e-3, atol=5e-3), (out_mean, ref_mean)
    assert jnp.allclose(out_sum, ref_sum, rtol=5e-3, atol=5e-3), (out_sum, ref_sum)

    # --- larger shape exercising the gridded / padded path (G > 1) ---
    B2, T2, D2 = 20, 50, 3
    position2 = jax.random.normal(k3, (B2, T2, D2), dtype=jnp.float32)
    velocity2 = jax.random.normal(k4, (B2, T2, D2), dtype=jnp.float32)
    time2 = (1.0 + 0.05 * jnp.arange(T2, dtype=jnp.float32))[None, :] \
            + 0.001 * jnp.arange(B2, dtype=jnp.float32)[:, None]

    out2 = taylor_series_linear(position2, velocity2, time2, reduction="mean",
                                batch_block=8)
    jax.block_until_ready(out2)
    ref2 = _reference(position2, velocity2, time2, "mean")
    assert jnp.allclose(out2, ref2, rtol=5e-3, atol=5e-3), (out2, ref2)

    print("KERNEL_OK")
</pallas_src>

<mosaic_0001>
module attributes {stable_mosaic.version = 11 : i64} {
  func.func @_taylor_series_linear_kernel(%arg0: i32, %arg1: memref<2x3x128xf32, #tpu.memory_space<vmem>>, %arg2: memref<2x3x128xf32, #tpu.memory_space<vmem>>, %arg3: memref<2x128xf32, #tpu.memory_space<vmem>>, %arg4: memref<1x8x128xf32, #tpu.memory_space<vmem>>) attributes {dimension_semantics = [#tpu.dimension_semantics<parallel>], iteration_bounds = array<i64: 1>, scalar_prefetch = 0 : i64, scratch_operands = 0 : i64, tpu.core_type = #tpu.core_type<tc>, window_params = [{transform_indices = @transform_0, window_bounds = array<i64: 2, 3, 128>}, {transform_indices = @transform_1, window_bounds = array<i64: 2, 3, 128>}, {transform_indices = @transform_2, window_bounds = array<i64: 2, 128>}, {transform_indices = @transform_3, window_bounds = array<i64: 1, 8, 128>}]} {
    %c0 = arith.constant 0 : index
    %c0_0 = arith.constant 0 : index
    %c0_1 = arith.constant 0 : index
    %0 = vector.load %arg1[%c0, %c0_0, %c0_1] : memref<2x3x128xf32, #tpu.memory_space<vmem>>, vector<2x3x128xf32>
    %c0_2 = arith.constant 0 : index
    %c0_3 = arith.constant 0 : index
    %c0_4 = arith.constant 0 : index
    %1 = vector.load %arg2[%c0_2, %c0_3, %c0_4] : memref<2x3x128xf32, #tpu.memory_space<vmem>>, vector<2x3x128xf32>
    %c0_5 = arith.constant 0 : index
    %c0_6 = arith.constant 0 : index
    %2 = vector.load %arg3[%c0_5, %c0_6] : memref<2x128xf32, #tpu.memory_space<vmem>>, vector<2x128xf32>
    %3 = vector.extract_strided_slice %0 {offsets = [0, 0, 1], sizes = [2, 3, 127], strides = [1, 1, 1]} : vector<2x3x128xf32> to vector<2x3x127xf32>
    %4 = vector.extract_strided_slice %0 {offsets = [0, 0, 0], sizes = [2, 3, 1], strides = [1, 1, 1]} : vector<2x3x128xf32> to vector<2x3x1xf32>
    %5 = tpu.concatenate %3, %4 in 2 : vector<2x3x127xf32>, vector<2x3x1xf32> -> vector<2x3x128xf32>
    %6 = vector.extract_strided_slice %2 {offsets = [0, 1], sizes = [2, 127], strides = [1, 1]} : vector<2x128xf32> to vector<2x127xf32>
    %7 = vector.extract_strided_slice %2 {offsets = [0, 0], sizes = [2, 1], strides = [1, 1]} : vector<2x128xf32> to vector<2x1xf32>
    %8 = tpu.concatenate %6, %7 in 1 : vector<2x127xf32>, vector<2x1xf32> -> vector<2x128xf32>
    %9 = tpu.iota {dimensions = array<i32: 1>} : vector<2x128xi32>
    %c7_i32 = arith.constant 7 : i32
    %10 = vector.broadcast %c7_i32 : i32 to vector<2x128xi32>
    %11 = arith.cmpi slt, %9, %10 : vector<2x128xi32>
    %12 = arith.subf %8, %2 : vector<2x128xf32>
    %cst = arith.constant 1.000000e+00 : f32
    %13 = vector.broadcast %cst : f32 to vector<2x128xf32>
    %14 = arith.select %11, %12, %13 : vector<2x128xi1>, vector<2x128xf32>
    %15 = tpu.reciprocal %14 {approx = true} : vector<2x128xf32> -> vector<2x128xf32>
    %16 = arith.subf %5, %0 : vector<2x3x128xf32>
    %17 = vector.shape_cast %15 : vector<2x128xf32> to vector<2x1x128xf32>
    %18 = vector.broadcast %17 : vector<2x1x128xf32> to vector<2x3x128xf32>
    %19 = arith.mulf %16, %18 : vector<2x3x128xf32>
    %20 = arith.subf %1, %19 : vector<2x3x128xf32>
    %21 = arith.mulf %20, %20 : vector<2x3x128xf32>
    %cst_7 = arith.constant dense<0.000000e+00> : vector<2x128xf32>
    %22 = vector.multi_reduction <add>, %21, %cst_7 [1] : vector<2x3x128xf32> to vector<2x128xf32>
    %23 = math.sqrt %22 : vector<2x128xf32>
    %cst_8 = arith.constant 0.000000e+00 : f32
    %24 = vector.broadcast %cst_8 : f32 to vector<2x128xf32>
    %25 = arith.select %11, %23, %24 : vector<2x128xi1>, vector<2x128xf32>
    %26 = vector.shape_cast %25 : vector<2x128xf32> to vector<1x2x128xf32>
    %cst_9 = arith.constant dense<0.000000e+00> : vector<1xf32>
    %27 = vector.multi_reduction <add>, %26, %cst_9 [1, 2] : vector<1x2x128xf32> to vector<1xf32>
    %28 = vector.shape_cast %27 : vector<1xf32> to vector<1x1x1xf32>
    %29 = vector.extract %28[0, 0, 0] : f32 from vector<1x1x1xf32>
    %30 = vector.broadcast %29 : f32 to vector<1x8x128xf32>
    %c0_10 = arith.constant 0 : index
    %c0_11 = arith.constant 0 : index
    %c0_12 = arith.constant 0 : index
    %31 = vector.load %arg4[%c0_10, %c0_11, %c0_12] : memref<1x8x128xf32, #tpu.memory_space<vmem>>, vector<1x8x128xf32>
    tpu.vector_store %arg4[%c0_10, %c0_11, %c0_12], %30 {strides = array<i32>} : memref<1x8x128xf32, #tpu.memory_space<vmem>>, vector<1x8x128xf32>,
    return
  }
  func.func @transform_0(%arg0: i32) -> (i32, i32, i32) {
    %c0_i32 = arith.constant 0 : i32
    %c0_i32_0 = arith.constant 0 : i32
    %c0_i32_1 = arith.constant 0 : i32
    return %arg0, %c0_i32, %c0_i32_0 : i32, i32, i32
  }
  func.func @transform_1(%arg0: i32) -> (i32, i32, i32) {
    %c0_i32 = arith.constant 0 : i32
    %c0_i32_0 = arith.constant 0 : i32
    %c0_i32_1 = arith.constant 0 : i32
    return %arg0, %c0_i32, %c0_i32_0 : i32, i32, i32
  }
  func.func @transform_2(%arg0: i32) -> (i32, i32) {
    %c0_i32 = arith.constant 0 : i32
    %c0_i32_0 = arith.constant 0 : i32
    return %arg0, %c0_i32 : i32, i32
  }
  func.func @transform_3(%arg0: i32) -> (i32, i32, i32) {
    %c0_i32 = arith.constant 0 : i32
    %c0_i32_0 = arith.constant 0 : i32
    %c0_i32_1 = arith.constant 0 : i32
    return %arg0, %c0_i32, %c0_i32_0 : i32, i32, i32
  }
}

</mosaic_0001>

<llo_original>
// kernel: tpu_custom_call.1
$region0: #{tpu_custom_call.1}
  #allocation0 [shape = 'u32[]', space=smem, size = 0x4, offset = 0x4, fixed_abs, tag = 'smem constant byte address 0x4 - core index']
  #allocation1 [shape = 'u32[144,128]{1,0:T(1,128)}', space=vmem, size = 0x12000, scoped, tag = 'internal scratch']
  %s0 = inlined_call_operand.vmem [shape: f32[2,3,128], index: 0, kind: input, shape index: {}]
  %s1 = inlined_call_operand.vmem [shape: f32[2,3,128], index: 1, kind: input, shape index: {}]
  %s2 = inlined_call_operand.vmem [shape: f32[2,128], index: 2, kind: input, shape index: {}]
  %s3 = inlined_call_operand.hbm [shape: f32[1,8,128], index: 3, kind: output, shape index: {}]
  %s4 = sld [smem:[#allocation0]]
  $region22: #{tpu_custom_call.1} parent=0
    _
  %s6 = ssub.s32 1, %s4
  %s7 = scalar_select 0, %s6, %s4
  $region1: #{tpu_custom_call.1} parent=0
    #allocation2 [shape = 'u8[4096]{0}', space=vmem, size = 0x1000, scoped, tag = 'output window, operand 0, single buffered']
    #allocation3 [shape = 's32[1]{0}', space=sflag, size = 0x4, scoped, tag = 'scoped memory for tpu_custom_call.1']
    %8 = vsyncpa [#allocation3], 0
    // Predicated region
    $region2: #{tpu_custom_call.1} parent=1 // pred_check
      _
    $region3: #{tpu_custom_call.1} parent=1 // pred_check_branch
      %10 = sbr.rel (0) target = $region5
    $region4: #{tpu_custom_call.1} parent=1 // pred_region
      _
    $region5: #{tpu_custom_call.1} parent=1 // pred_fallthru
      _
    // Predicated region
    $region6: #{tpu_custom_call.1} parent=1 // pred_check
      _
    $region7: #{tpu_custom_call.1} parent=1 // pred_check_branch
      %12 = sbr.rel (0) target = $region9
    $region8: #{tpu_custom_call.1} parent=1 // pred_region
      _
    $region9: #{tpu_custom_call.1} parent=1 // pred_fallthru
      _
    // Predicated region
    $region10: #{tpu_custom_call.1} parent=1 // pred_check
      _
    $region11: #{tpu_custom_call.1} parent=1 // pred_check_branch
      %14 = sbr.rel (0) target = $region13
    $region12: #{tpu_custom_call.1} parent=1 // pred_region
      _
    $region13: #{tpu_custom_call.1} parent=1 // pred_fallthru
      _
    %v15 = vld [vmem:[%s0] sm:$0x7]
    %v16 = vld [vmem:[%s0 + $0x4] sm:$0x7]
    %v17 = vld [vmem:[%s1] sm:$0x7]
    %v18 = vld [vmem:[%s1 + $0x4] sm:$0x7]
    %v19 = vld [vmem:[%s2] sm:$0x3]
    %22 = vrot.lane.b32.xlu0 %v15, 127
    %v23 = vpop.permute.xlu0 %22
    %24 = vrot.lane.b32.xlu0 %v16, 127
    %v25 = vpop.permute.xlu0 %24
    %29 = vrot.lane.b32.xlu0 %v19, 127
    %v30 = vpop.permute.xlu0 %29
    %v32 = vlaneseq
    %v33 = vand.u32 %v32, 127
    %vm34 = vcmp.lt.s32.totalorder %v33, 7
    %v35 = vsub.f32 %v30, %v19
    %v36 = vsel %vm34, %v35, 1.0
    %v37 = vrcp.pop %v36
    %v38 = vsub.f32 %v23, %v15
    %v39 = vsub.f32 %v25, %v16
    %v42 = vunpack.c.l.s4 1966171168
    %v43 = vunpack.c.0.s8 %v42
    %v44 = vlaneseq
    %v45 = vshrl.u32 %v44, 7
    %v46 = vsub.s32 %v43, %v45
    %v47 = vrot.slane %v37, %v46
    %v48 = vcombine.high %v47, %v47
    %v50 = vunpack.c.l.s4 1966171168
    %v51 = vunpack.c.0.s8 %v50
    %v52 = vlaneseq
    %v53 = vshrl.u32 %v52, 7
    %v54 = vsub.s32 %v51, %v53
    %v55 = vrot.slane %v47, %v54
    %v57 = vunpack.c.l.s4 1966171168
    %v58 = vunpack.c.0.s8 %v57
    %v59 = vlaneseq
    %v60 = vshrl.u32 %v59, 7
    %v61 = vsub.s32 %v58, %v60
    %v62 = vrot.slane %v48, %v61
    %v63 = vlaneseq
    %v64 = vshrl.u32 %v63, 7
    %v65 = vsub.s32 0, %v64
    %v66 = vrot.slane %v55, %v65
    %v67 = vlaneseq
    %v68 = vshrl.u32 %v67, 7
    %v69 = vsub.s32 0, %v68
    %v70 = vrot.slane %v62, %v69
    %v73 = vmul.f32 %v38, %v66
    %v74 = vmul.f32 %v39, %v70
    %v75 = vsub.f32 %v17, %v73
    %v76 = vsub.f32 %v18, %v74
    %v77 = vmul.f32 %v75, %v75
    %v78 = vmul.f32 %v76, %v76
    %vm79 = vcmask 1042432
    %v80 = vsel %vm79, %v77, 0.0
    %v81 = vrot.slane %v80, 4
    %v82 = vadd.f32 %v80, %v81
    %v83 = vrot.slane %v82, 2
    %v84 = vadd.f32 %v82, %v83
    %v85 = vrot.slane %v84, 1
    %v86 = vadd.f32 %v84, %v85
    %v87 = vsel %vm79, %v78, 0.0
    %v88 = vrot.slane %v87, 4
    %v89 = vadd.f32 %v87, %v88
    %v90 = vrot.slane %v89, 2
    %v91 = vadd.f32 %v89, %v90
    %v92 = vrot.slane %v91, 1
    %v93 = vadd.f32 %v91, %v92
    %v94 = vrsqrt.pop %v86
    %v95 = vmul.f32 %v86, %v94
    %vm96 = vcmp.eq.f32.partialorder %v86, inf
    %v97 = vsel %vm96, %v86, %v95
    %vm98 = vcmp.eq.f32.partialorder %v86, 0.0
    %v99 = vand.u32 %v86, 2147483648
    %v100 = vsel %vm98, %v99, %v97
    %v101 = vrsqrt.pop %v93
    %v102 = vmul.f32 %v93, %v101
    %vm103 = vcmp.eq.f32.partialorder %v93, inf
    %v104 = vsel %vm103, %v93, %v102
    %vm105 = vcmp.eq.f32.partialorder %v93, 0.0
    %v106 = vand.u32 %v93, 2147483648
    %v107 = vsel %vm105, %v106, %v104
    %vm110 = vcmask 1041409
    %v111 = vsel %vm110, %v107, %v100
    %v113 = vsel %vm34, %v111, 0.0
    %vm114 = vcmask 1041408
    %v115 = vsel %vm114, %v113, 0.0
    %116 = vadd.xlane.f32.xlu0 %v115
    %v117 = vpop.xlane.xlu0 %116
    %v118 = vrot.slane %v117, 4
    %v119 = vadd.f32 %v117, %v118
    %v120 = vrot.slane %v119, 2
    %v121 = vadd.f32 %v119, %v120
    %v122 = vrot.slane %v121, 1
    %v123 = vadd.f32 %v121, %v122
    %s124 = vtos %v123
    %v125 = vstv %s124
    %126 = vst [vmem:[#allocation2] sm:$0xff] %v125
    // Predicated region
    $region14: #{tpu_custom_call.1} parent=1 // pred_check
      _
    $region15: #{tpu_custom_call.1} parent=1 // pred_check_branch
      %128 = sbr.rel (0) target = $region17
    $region16: #{tpu_custom_call.1} parent=1 // pred_region
      %s130 = ssub.s32 128, 128
      %131 = vsyncadd [#allocation3], %s130
      %s133 = sshll.u32 [#allocation2], 4
      %s134 = int_to_ptr.vmem [resolvable:$true] %s133
      %136 = dma.vmem_to_hbm [thread:$0]  %s134, 128, %s3, [#allocation3]
    $region17: #{tpu_custom_call.1} parent=1 // pred_fallthru
      _
    // Predicated region
    $region18: #{tpu_custom_call.1} parent=1 // pred_check
      _
    $region19: #{tpu_custom_call.1} parent=1 // pred_check_branch
      %138 = sbr.rel (0) target = $region21
    $region20: #{tpu_custom_call.1} parent=1 // pred_region
      %139 = dma.done [#allocation3], 128
    $region21: #{tpu_custom_call.1} parent=1 // pred_fallthru
      _
    %140 = vsyncpa [#allocation3], 1

</llo_original>
